<compile_context>
chip_gen: v7x
topology: tpu7x:2x2x1
jax: 0.10.0
libtpu: 0.0.40
codegen_flags: <defaults>
</compile_context>

<pallas_src>
import math
import functools

import jax
import jax.numpy as jnp
from jax.experimental import pallas as pl
from jax.experimental.pallas import tpu as pltpu

HIDDEN = 128


def _round_up(x, m):
    return ((x + m - 1) // m) * m


def _pick_tile(batch, block_b):
    """Balanced batch tile: split B into ceil(B/block_b) near-equal tiles,
    rounded up to a sublane multiple of 8.  Avoids a mostly-padding last tile
    (e.g. B=4100 -> 2 tiles of 2056 instead of 4096 + 4-row tile)."""
    batch = max(batch, 1)
    n_tiles = -(-batch // block_b)                 # ceil
    tb = _round_up(-(-batch // n_tiles), 8)        # ceil, then sublane-align
    return tb


def dqn_kernel(x_ref, w1_ref, b1_ref, w2_ref, b2_ref, w3_ref, b3_ref, o_ref):
    # x tile: (tb, n_obs) f32.  Weights bf16 (VMEM-resident), biases f32.
    x = x_ref[...]                                  # f32
    tb, n_obs = x.shape

    if n_obs <= 8:
        # Layer 1 on the VPU: K=n_obs is tiny, so an MXU pass would be nearly
        # empty.  n_obs broadcast multiply-adds in f32 (uses idle VALU slots).
        w1f = w1_ref[...].astype(jnp.float32)       # (n_obs, 128)
        h1 = jnp.broadcast_to(b1_ref[...], (tb, HIDDEN))
        for k in range(n_obs):                      # static trip count
            h1 = h1 + x[:, k:k + 1] * w1f[k:k + 1, :]
    else:
        # MXU fallback for larger observation dims.
        h1 = jnp.dot(x.astype(jnp.bfloat16), w1_ref[...],
                     preferred_element_type=jnp.float32) + b1_ref[...]

    h1 = jnp.maximum(h1, 0.0).astype(jnp.bfloat16)

    h2 = jnp.dot(h1, w2_ref[...], preferred_element_type=jnp.float32) + b2_ref[...]
    h2 = jnp.maximum(h2, 0.0).astype(jnp.bfloat16)

    out = jnp.dot(h2, w3_ref[...], preferred_element_type=jnp.float32) + b3_ref[...]
    o_ref[...] = out.astype(o_ref.dtype)            # unpadded (tb, n_actions) store


def prepare_params(params):
    """One-time parameter prep (call at init / after each param update, NOT per
    forward): weights -> bf16 MXU operands [in, out], biases -> f32 (1, out)."""
    w1, b1, w2, b2, w3, b3 = params
    return (
        w1.astype(jnp.bfloat16), jnp.reshape(b1, (1, -1)).astype(jnp.float32),
        w2.astype(jnp.bfloat16), jnp.reshape(b2, (1, -1)).astype(jnp.float32),
        w3.astype(jnp.bfloat16), jnp.reshape(b3, (1, -1)).astype(jnp.float32),
    )


@functools.partial(jax.jit, static_argnames=("block_b",))
def dqn_forward(x, params, block_b=4096):
    """x: (B, n_obs) f32.  params: preferably prepare_params(...) output
    (bf16 weights [in, out], f32 (1, out) biases).  Returns (B, n_actions) f32."""
    w1, b1, w2, b2, w3, b3 = params
    # Defensive casts: trace-time no-ops when params were pre-prepared.
    w1 = w1.astype(jnp.bfloat16)
    w2 = w2.astype(jnp.bfloat16)
    w3 = w3.astype(jnp.bfloat16)
    b1 = jnp.reshape(b1, (1, -1)).astype(jnp.float32)
    b2 = jnp.reshape(b2, (1, -1)).astype(jnp.float32)
    b3 = jnp.reshape(b3, (1, -1)).astype(jnp.float32)

    B, n_obs = x.shape
    n_actions = w3.shape[1]

    # --- balanced batch tiling ------------------------------------------------
    tb = _pick_tile(B, block_b)
    b_pad = _round_up(B, tb)
    if b_pad != B:
        x = jnp.pad(x, ((0, b_pad - B), (0, 0)))
    grid = (b_pad // tb,)

    # Weights/biases: constant index_map -> DMA'd once, VMEM-resident.
    const2d = lambda shape: pl.BlockSpec(shape, lambda i: (0, 0))

    flops = 2 * b_pad * (n_obs * HIDDEN + HIDDEN * HIDDEN + HIDDEN * n_actions)
    bytes_accessed = (
        b_pad * n_obs * 4                                              # x (f32)
        + b_pad * n_actions * 4                                        # out (f32)
        + (n_obs * HIDDEN + HIDDEN * HIDDEN + HIDDEN * n_actions) * 2  # weights bf16
        + (HIDDEN + HIDDEN + n_actions) * 4                            # biases f32
    )

    out_pad = pl.pallas_call(
        dqn_kernel,
        out_shape=jax.ShapeDtypeStruct((b_pad, n_actions), jnp.float32),
        grid=grid,
        in_specs=[
            pl.BlockSpec((tb, n_obs), lambda i: (i, 0)),       # x tile (f32)
            const2d((n_obs, HIDDEN)),                          # w1
            const2d((1, HIDDEN)),                              # b1
            const2d((HIDDEN, HIDDEN)),                         # w2
            const2d((1, HIDDEN)),                              # b2
            const2d((HIDDEN, n_actions)),                      # w3 (unpadded)
            const2d((1, n_actions)),                           # b3 (unpadded)
        ],
        # Last block dim == full array dim (n_actions), so the (8,128) rule is
        # satisfied without lane padding -> minimal HBM writeback.
        out_specs=pl.BlockSpec((tb, n_actions), lambda i: (i, 0)),
        compiler_params=pltpu.CompilerParams(
            dimension_semantics=("parallel",),
        ),
        cost_estimate=pl.CostEstimate(
            flops=int(flops),
            transcendentals=0,
            bytes_accessed=int(bytes_accessed),
        ),
    )(x, w1, b1, w2, b2, w3, b3)

    return out_pad[:B, :]


def init_params(key, n_observations, n_actions, hidden=HIDDEN):
    """Deterministic init mimicking PyTorch nn.Linear default:
    U(-1/sqrt(fan_in), 1/sqrt(fan_in)) for both weight and bias.
    Weights stored as [in, out]; biases as (1, out)."""
    keys = jax.random.split(key, 6)

    def linear(kw, kb, fan_in, fan_out):
        bound = 1.0 / math.sqrt(fan_in)
        w = jax.random.uniform(kw, (fan_in, fan_out), jnp.float32, -bound, bound)
        b = jax.random.uniform(kb, (1, fan_out), jnp.float32, -bound, bound)
        return w, b

    w1, b1 = linear(keys[0], keys[1], n_observations, hidden)
    w2, b2 = linear(keys[2], keys[3], hidden, hidden)
    w3, b3 = linear(keys[4], keys[5], hidden, n_actions)
    return (w1, b1, w2, b2, w3, b3)


def dqn_reference(x, params):
    w1, b1, w2, b2, w3, b3 = params
    h1 = jnp.maximum(x @ w1 + b1, 0.0)
    h2 = jnp.maximum(h1 @ w2 + b2, 0.0)
    return h2 @ w3 + b3


if __name__ == "__main__":
    # CartPole-like small shapes: n_observations=4, n_actions=2, batch=8.
    B, n_observations, n_actions = 8, 4, 2

    key = jax.random.PRNGKey(0)
    k_x, k_p = jax.random.split(key)
    x = jax.random.normal(k_x, (B, n_observations), dtype=jnp.float32)
    params = init_params(k_p, n_observations, n_actions)
    prepped = prepare_params(params)   # one-time cast/pack (out of hot path)

    out = jax.block_until_ready(dqn_forward(x, prepped))
    ref = dqn_reference(x, params)
    assert out.shape == (B, n_actions)
    # bf16 matmul operands (layers 2/3) -> loosened tolerance vs f32 reference.
    assert jnp.allclose(out, ref, atol=2e-2, rtol=2e-2), (
        f"max abs err {jnp.max(jnp.abs(out - ref))}"
    )

    # Ragged, multi-tile batch: small block_b forces several balanced grid steps.
    B2 = 1000
    x2 = jax.random.normal(jax.random.PRNGKey(1), (B2, n_observations), jnp.float32)
    out2 = jax.block_until_ready(dqn_forward(x2, prepped, block_b=256))
    ref2 = dqn_reference(x2, params)
    assert out2.shape == (B2, n_actions)
    assert jnp.allclose(out2, ref2, atol=2e-2, rtol=2e-2), (
        f"max abs err {jnp.max(jnp.abs(out2 - ref2))}"
    )

    print("KERNEL_OK")
</pallas_src>

<mosaic_0001>
module attributes {stable_mosaic.version = 11 : i64} {
  func.func @dqn_kernel(%arg0: i32, %arg1: memref<8x4xf32, #tpu.memory_space<vmem>>, %arg2: memref<4x128xbf16, #tpu.memory_space<vmem>>, %arg3: memref<1x128xf32, #tpu.memory_space<vmem>>, %arg4: memref<128x128xbf16, #tpu.memory_space<vmem>>, %arg5: memref<1x128xf32, #tpu.memory_space<vmem>>, %arg6: memref<128x2xbf16, #tpu.memory_space<vmem>>, %arg7: memref<1x2xf32, #tpu.memory_space<vmem>>, %arg8: memref<8x2xf32, #tpu.memory_space<vmem>>) attributes {dimension_semantics = [#tpu.dimension_semantics<parallel>], iteration_bounds = array<i64: 1>, scalar_prefetch = 0 : i64, scratch_operands = 0 : i64, tpu.core_type = #tpu.core_type<tc>, window_params = [{transform_indices = @transform_0, window_bounds = array<i64: 8, 4>}, {pipeline_mode = #tpu.pipeline_mode<synchronous>, transform_indices = @transform_1, window_bounds = array<i64: 4, 128>}, {pipeline_mode = #tpu.pipeline_mode<synchronous>, transform_indices = @transform_2, window_bounds = array<i64: 1, 128>}, {pipeline_mode = #tpu.pipeline_mode<synchronous>, transform_indices = @transform_3, window_bounds = array<i64: 128, 128>}, {pipeline_mode = #tpu.pipeline_mode<synchronous>, transform_indices = @transform_4, window_bounds = array<i64: 1, 128>}, {pipeline_mode = #tpu.pipeline_mode<synchronous>, transform_indices = @transform_5, window_bounds = array<i64: 128, 2>}, {pipeline_mode = #tpu.pipeline_mode<synchronous>, transform_indices = @transform_6, window_bounds = array<i64: 1, 2>}, {transform_indices = @transform_7, window_bounds = array<i64: 8, 2>}]} {
    %c0 = arith.constant 0 : index
    %c0_0 = arith.constant 0 : index
    %0 = vector.load %arg1[%c0, %c0_0] : memref<8x4xf32, #tpu.memory_space<vmem>>, vector<8x4xf32>
    %c0_1 = arith.constant 0 : index
    %c0_2 = arith.constant 0 : index
    %1 = vector.load %arg2[%c0_1, %c0_2] : memref<4x128xbf16, #tpu.memory_space<vmem>>, vector<4x128xbf16>
    %2 = arith.extf %1 : vector<4x128xbf16> to vector<4x128xf32>
    %c0_3 = arith.constant 0 : index
    %c0_4 = arith.constant 0 : index
    %3 = vector.load %arg3[%c0_3, %c0_4] : memref<1x128xf32, #tpu.memory_space<vmem>>, vector<1x128xf32>
    %4 = vector.shape_cast %3 : vector<1x128xf32> to vector<1x128xf32>
    %5 = vector.broadcast %4 : vector<1x128xf32> to vector<8x128xf32>
    %6 = vector.extract_strided_slice %0 {offsets = [0, 0], sizes = [8, 1], strides = [1, 1]} : vector<8x4xf32> to vector<8x1xf32>
    %7 = vector.extract_strided_slice %2 {offsets = [0, 0], sizes = [1, 128], strides = [1, 1]} : vector<4x128xf32> to vector<1x128xf32>
    %8 = vector.broadcast %6 : vector<8x1xf32> to vector<8x128xf32>
    %9 = vector.broadcast %7 : vector<1x128xf32> to vector<8x128xf32>
    %10 = arith.mulf %8, %9 : vector<8x128xf32>
    %11 = arith.addf %5, %10 : vector<8x128xf32>
    %12 = vector.extract_strided_slice %0 {offsets = [0, 1], sizes = [8, 1], strides = [1, 1]} : vector<8x4xf32> to vector<8x1xf32>
    %13 = vector.extract_strided_slice %2 {offsets = [1, 0], sizes = [1, 128], strides = [1, 1]} : vector<4x128xf32> to vector<1x128xf32>
    %14 = vector.broadcast %12 : vector<8x1xf32> to vector<8x128xf32>
    %15 = vector.broadcast %13 : vector<1x128xf32> to vector<8x128xf32>
    %16 = arith.mulf %14, %15 : vector<8x128xf32>
    %17 = arith.addf %11, %16 : vector<8x128xf32>
    %18 = vector.extract_strided_slice %0 {offsets = [0, 2], sizes = [8, 1], strides = [1, 1]} : vector<8x4xf32> to vector<8x1xf32>
    %19 = vector.extract_strided_slice %2 {offsets = [2, 0], sizes = [1, 128], strides = [1, 1]} : vector<4x128xf32> to vector<1x128xf32>
    %20 = vector.broadcast %18 : vector<8x1xf32> to vector<8x128xf32>
    %21 = vector.broadcast %19 : vector<1x128xf32> to vector<8x128xf32>
    %22 = arith.mulf %20, %21 : vector<8x128xf32>
    %23 = arith.addf %17, %22 : vector<8x128xf32>
    %24 = vector.extract_strided_slice %0 {offsets = [0, 3], sizes = [8, 1], strides = [1, 1]} : vector<8x4xf32> to vector<8x1xf32>
    %25 = vector.extract_strided_slice %2 {offsets = [3, 0], sizes = [1, 128], strides = [1, 1]} : vector<4x128xf32> to vector<1x128xf32>
    %26 = vector.broadcast %24 : vector<8x1xf32> to vector<8x128xf32>
    %27 = vector.broadcast %25 : vector<1x128xf32> to vector<8x128xf32>
    %28 = arith.mulf %26, %27 : vector<8x128xf32>
    %29 = arith.addf %23, %28 : vector<8x128xf32>
    %cst = arith.constant 0.000000e+00 : f32
    %30 = vector.broadcast %cst : f32 to vector<8x128xf32>
    %31 = arith.maximumf %29, %30 : vector<8x128xf32>
    %32 = arith.truncf %31 : vector<8x128xf32> to vector<8x128xbf16>
    %c0_5 = arith.constant 0 : index
    %c0_6 = arith.constant 0 : index
    %33 = vector.load %arg4[%c0_5, %c0_6] : memref<128x128xbf16, #tpu.memory_space<vmem>>, vector<128x128xbf16>
    %cst_7 = arith.constant dense<0.000000e+00> : vector<8x128xf32>
    %34 = tpu.matmul %32, %33, %cst_7 {dimension_numbers = #tpu.dot_dimension_numbers<[1], [0], [0], [1], [0, 0, 1, 1], [], []>} : vector<8x128xbf16>, vector<128x128xbf16>, vector<8x128xf32> -> vector<8x128xf32>
    %c0_8 = arith.constant 0 : index
    %c0_9 = arith.constant 0 : index
    %35 = vector.load %arg5[%c0_8, %c0_9] : memref<1x128xf32, #tpu.memory_space<vmem>>, vector<1x128xf32>
    %36 = vector.broadcast %35 : vector<1x128xf32> to vector<8x128xf32>
    %37 = arith.addf %34, %36 : vector<8x128xf32>
    %cst_10 = arith.constant 0.000000e+00 : f32
    %38 = vector.broadcast %cst_10 : f32 to vector<8x128xf32>
    %39 = arith.maximumf %37, %38 : vector<8x128xf32>
    %40 = arith.truncf %39 : vector<8x128xf32> to vector<8x128xbf16>
    %c0_11 = arith.constant 0 : index
    %c0_12 = arith.constant 0 : index
    %41 = vector.load %arg6[%c0_11, %c0_12] : memref<128x2xbf16, #tpu.memory_space<vmem>>, vector<128x2xbf16>
    %cst_13 = arith.constant dense<0.000000e+00> : vector<8x2xf32>
    %42 = tpu.matmul %40, %41, %cst_13 {dimension_numbers = #tpu.dot_dimension_numbers<[1], [0], [0], [1], [0, 0, 1, 1], [], []>} : vector<8x128xbf16>, vector<128x2xbf16>, vector<8x2xf32> -> vector<8x2xf32>
    %c0_14 = arith.constant 0 : index
    %c0_15 = arith.constant 0 : index
    %43 = vector.load %arg7[%c0_14, %c0_15] : memref<1x2xf32, #tpu.memory_space<vmem>>, vector<1x2xf32>
    %44 = vector.broadcast %43 : vector<1x2xf32> to vector<8x2xf32>
    %45 = arith.addf %42, %44 : vector<8x2xf32>
    %c0_16 = arith.constant 0 : index
    %c0_17 = arith.constant 0 : index
    %46 = vector.load %arg8[%c0_16, %c0_17] : memref<8x2xf32, #tpu.memory_space<vmem>>, vector<8x2xf32>
    tpu.vector_store %arg8[%c0_16, %c0_17], %45 {strides = array<i32>} : memref<8x2xf32, #tpu.memory_space<vmem>>, vector<8x2xf32>,
    return
  }
  func.func @transform_0(%arg0: i32) -> (i32, i32) {
    %c0_i32 = arith.constant 0 : i32
    %c0_i32_0 = arith.constant 0 : i32
    return %arg0, %c0_i32 : i32, i32
  }
  func.func @transform_1(%arg0: i32) -> (i32, i32) {
    %c0_i32 = arith.constant 0 : i32
    %c0_i32_0 = arith.constant 0 : i32
    %c0_i32_1 = arith.constant 0 : i32
    return %c0_i32, %c0_i32_0 : i32, i32
  }
  func.func @transform_2(%arg0: i32) -> (i32, i32) {
    %c0_i32 = arith.constant 0 : i32
    %c0_i32_0 = arith.constant 0 : i32
    %c0_i32_1 = arith.constant 0 : i32
    return %c0_i32, %c0_i32_0 : i32, i32
  }
  func.func @transform_3(%arg0: i32) -> (i32, i32) {
    %c0_i32 = arith.constant 0 : i32
    %c0_i32_0 = arith.constant 0 : i32
    %c0_i32_1 = arith.constant 0 : i32
    return %c0_i32, %c0_i32_0 : i32, i32
  }
  func.func @transform_4(%arg0: i32) -> (i32, i32) {
    %c0_i32 = arith.constant 0 : i32
    %c0_i32_0 = arith.constant 0 : i32
    %c0_i32_1 = arith.constant 0 : i32
    return %c0_i32, %c0_i32_0 : i32, i32
  }
  func.func @transform_5(%arg0: i32) -> (i32, i32) {
    %c0_i32 = arith.constant 0 : i32
    %c0_i32_0 = arith.constant 0 : i32
    %c0_i32_1 = arith.constant 0 : i32
    return %c0_i32, %c0_i32_0 : i32, i32
  }
  func.func @transform_6(%arg0: i32) -> (i32, i32) {
    %c0_i32 = arith.constant 0 : i32
    %c0_i32_0 = arith.constant 0 : i32
    %c0_i32_1 = arith.constant 0 : i32
    return %c0_i32, %c0_i32_0 : i32, i32
  }
  func.func @transform_7(%arg0: i32) -> (i32, i32) {
    %c0_i32 = arith.constant 0 : i32
    %c0_i32_0 = arith.constant 0 : i32
    return %arg0, %c0_i32 : i32, i32
  }
}

</mosaic_0001>

<llo_original>
// kernel: dqn_forward.1
$region0: #{dqn_forward.1}
  #allocation0 [shape = 'u32[]', space=smem, size = 0x4, offset = 0x4, fixed_abs, tag = 'smem constant byte address 0x4 - core index']
  #allocation1 [shape = 'u32[144,128]{1,0:T(1,128)}', space=vmem, size = 0x12000, scoped, tag = 'internal scratch']
  %s0 = inlined_call_operand.vmem [shape: f32[8,4], index: 0, kind: input, shape index: {}]
  %s1 = inlined_call_operand.vmem [shape: bf16[4,128], index: 1, kind: input, shape index: {}]
  %s2 = inlined_call_operand.vmem [shape: f32[1,128], index: 2, kind: input, shape index: {}]
  %s3 = inlined_call_operand.vmem [shape: bf16[128,128], index: 3, kind: input, shape index: {}]
  %s4 = inlined_call_operand.vmem [shape: f32[1,128], index: 4, kind: input, shape index: {}]
  %s5 = inlined_call_operand.vmem [shape: bf16[128,2], index: 5, kind: input, shape index: {}]
  %s6 = inlined_call_operand.vmem [shape: f32[1,2], index: 6, kind: input, shape index: {}]
  %s7 = inlined_call_operand.vmem [shape: f32[8,2], index: 7, kind: output, shape index: {}]
  %s8 = sld [smem:[#allocation0]]
  $region38: #{dqn_forward.1} parent=0
    _
  %s10 = ssub.s32 1, %s8
  %s11 = scalar_select 0, %s10, %s8
  // Predicated region
  $region2: #{dqn_forward.1} parent=0 // pred_check
    _
  $region3: #{dqn_forward.1} parent=0 // pred_check_branch
    %13 = sbr.rel (0) target = $region5
  $region4: #{dqn_forward.1} parent=0 // pred_region
    _
  $region5: #{dqn_forward.1} parent=0 // pred_fallthru
    _
  // Predicated region
  $region6: #{dqn_forward.1} parent=0 // pred_check
    _
  $region7: #{dqn_forward.1} parent=0 // pred_check_branch
    %15 = sbr.rel (0) target = $region9
  $region8: #{dqn_forward.1} parent=0 // pred_region
    _
  $region9: #{dqn_forward.1} parent=0 // pred_fallthru
    _
  // Predicated region
  $region10: #{dqn_forward.1} parent=0 // pred_check
    _
  $region11: #{dqn_forward.1} parent=0 // pred_check_branch
    %17 = sbr.rel (0) target = $region13
  $region12: #{dqn_forward.1} parent=0 // pred_region
    _
  $region13: #{dqn_forward.1} parent=0 // pred_fallthru
    _
  // Predicated region
  $region14: #{dqn_forward.1} parent=0 // pred_check
    _
  $region15: #{dqn_forward.1} parent=0 // pred_check_branch
    %19 = sbr.rel (0) target = $region17
  $region16: #{dqn_forward.1} parent=0 // pred_region
    _
  $region17: #{dqn_forward.1} parent=0 // pred_fallthru
    _
  // Predicated region
  $region18: #{dqn_forward.1} parent=0 // pred_check
    _
  $region19: #{dqn_forward.1} parent=0 // pred_check_branch
    %21 = sbr.rel (0) target = $region21
  $region20: #{dqn_forward.1} parent=0 // pred_region
    _
  $region21: #{dqn_forward.1} parent=0 // pred_fallthru
    _
  // Predicated region
  $region22: #{dqn_forward.1} parent=0 // pred_check
    _
  $region23: #{dqn_forward.1} parent=0 // pred_check_branch
    %23 = sbr.rel (0) target = $region25
  $region24: #{dqn_forward.1} parent=0 // pred_region
    _
  $region25: #{dqn_forward.1} parent=0 // pred_fallthru
    _
  // Predicated region
  $region26: #{dqn_forward.1} parent=0 // pred_check
    _
  $region27: #{dqn_forward.1} parent=0 // pred_check_branch
    %25 = sbr.rel (0) target = $region29
  $region28: #{dqn_forward.1} parent=0 // pred_region
    _
  $region29: #{dqn_forward.1} parent=0 // pred_fallthru
    _
  %v27 = vld [vmem:[%s0] sm:$0xff]
  %v28 = vld [vmem:[%s1] sm:$0x3]
  %v29 = vunpack.c.l.bf16 %v28
  %v30 = vld [vmem:[%s2] sm:$0x1]
  %v32 = vlaneseq
  %v33 = vshrl.u32 %v32, 7
  %v34 = vsub.s32 0, %v33
  %v35 = vrot.slane %v30, %v34
  %38 = vset.pattern.permute.xlu0 0
  %39 = vperm.xlu0 %38, %v27
  %v40 = vpop.permute.xlu0 %39
  %v42 = vlaneseq
  %v43 = vshrl.u32 %v42, 7
  %v44 = vsub.s32 0, %v43
  %v45 = vrot.slane %v29, %v44
  %v46 = vmul.f32 %v40, %v45
  %v47 = vadd.f32 %v35, %v46
  %48 = vset.pattern.permute.xlu0 1
  %49 = vperm.xlu0 %48, %v27
  %v50 = vpop.permute.xlu0 %49
  %v52 = vlaneseq
  %v53 = vshrl.u32 %v52, 7
  %v54 = vsub.s32 1, %v53
  %v55 = vrot.slane %v29, %v54
  %v56 = vmul.f32 %v50, %v55
  %v57 = vadd.f32 %v47, %v56
  %58 = vset.pattern.permute.xlu0 2
  %59 = vperm.xlu0 %58, %v27
  %v60 = vpop.permute.xlu0 %59
  %v62 = vlaneseq
  %v63 = vshrl.u32 %v62, 7
  %v64 = vsub.s32 2, %v63
  %v65 = vrot.slane %v29, %v64
  %v66 = vmul.f32 %v60, %v65
  %v67 = vadd.f32 %v57, %v66
  %68 = vset.pattern.permute.xlu0 3
  %69 = vperm.xlu0 %68, %v27
  %v70 = vpop.permute.xlu0 %69
  %v72 = vlaneseq
  %v73 = vshrl.u32 %v72, 7
  %v74 = vsub.s32 3, %v73
  %v75 = vrot.slane %v29, %v74
  %v76 = vmul.f32 %v70, %v75
  %v77 = vadd.f32 %v67, %v76
  %v78 = vmax.f32 %v77, 0.0
  %v79 = vpack.c.bf16 %v78, %v78
  %v80 = vld [vmem:[%s3] sm:$0xf]
  %v81 = vld [vmem:[%s3 + $0x4] sm:$0xf]
  %v82 = vld [vmem:[%s3 + $0x8] sm:$0xf]
  %v83 = vld [vmem:[%s3 + $0xc] sm:$0xf]
  %v84 = vld [vmem:[%s3 + $0x10] sm:$0xf]
  %v85 = vld [vmem:[%s3 + $0x14] sm:$0xf]
  %v86 = vld [vmem:[%s3 + $0x18] sm:$0xf]
  %v87 = vld [vmem:[%s3 + $0x1c] sm:$0xf]
  %v88 = vld [vmem:[%s3 + $0x20] sm:$0xf]
  %v89 = vld [vmem:[%s3 + $0x24] sm:$0xf]
  %v90 = vld [vmem:[%s3 + $0x28] sm:$0xf]
  %v91 = vld [vmem:[%s3 + $0x2c] sm:$0xf]
  %v92 = vld [vmem:[%s3 + $0x30] sm:$0xf]
  %v93 = vld [vmem:[%s3 + $0x34] sm:$0xf]
  %v94 = vld [vmem:[%s3 + $0x38] sm:$0xf]
  %v95 = vld [vmem:[%s3 + $0x3c] sm:$0xf]
  %v96 = vld [vmem:[%s4] sm:$0x1]
  %v98 = vlaneseq
  %v99 = vshrl.u32 %v98, 7
  %v100 = vsub.s32 0, %v99
  %v101 = vrot.slane %v96, %v100
  %v119 = vunpack.c.l.b16 %v80
  %v120 = vunpack.c.l.b16 %v81
  %v121 = vunpack.c.l.b16 %v82
  %v122 = vunpack.c.l.b16 %v83
  %v123 = vunpack.c.l.b16 %v84
  %v124 = vunpack.c.l.b16 %v85
  %v125 = vunpack.c.l.b16 %v86
  %v126 = vunpack.c.l.b16 %v87
  %v127 = vunpack.c.l.b16 %v88
  %v128 = vunpack.c.l.b16 %v89
  %v129 = vunpack.c.l.b16 %v90
  %v130 = vunpack.c.l.b16 %v91
  %v131 = vunpack.c.l.b16 %v92
  %v132 = vunpack.c.l.b16 %v93
  %v133 = vunpack.c.l.b16 %v94
  %v134 = vunpack.c.l.b16 %v95
  %v135 = vpack.c.b16 %v120, %v119
  %v136 = vpack.c.b16 %v122, %v121
  %v137 = vpack.c.b16 %v124, %v123
  %v138 = vpack.c.b16 %v126, %v125
  %v139 = vpack.c.b16 %v128, %v127
  %v140 = vpack.c.b16 %v130, %v129
  %v141 = vpack.c.b16 %v132, %v131
  %v142 = vpack.c.b16 %v134, %v133
  %151 = vmatprep.subr.bf16.mxu0 0
  %152 = vmatpush1.bf16.msra.mxu0 %v135
  %153 = vmatprep.subr.bf16.mxu0 0
  %154 = vmatpush1.bf16.msra.mxu0 %v136
  %155 = vmatprep.subr.bf16.mxu0 0
  %156 = vmatpush1.bf16.msra.mxu0 %v137
  %157 = vmatprep.subr.bf16.mxu0 0
  %158 = vmatpush1.bf16.msra.mxu0 %v138
  %159 = vmatprep.subr.bf16.mxu0 0
  %160 = vmatpush1.bf16.msra.mxu0 %v139
  %161 = vmatprep.subr.bf16.mxu0 0
  %162 = vmatpush1.bf16.msra.mxu0 %v140
  %163 = vmatprep.subr.bf16.mxu0 0
  %164 = vmatpush1.bf16.msra.mxu0 %v141
  %165 = vmatprep.subr.bf16.mxu0 0
  %166 = vmatpush1.bf16.msra.mxu0 %v142
  %167 = vmatprep.subr.bf16.mxu0 0
  %168 = vmatpush1.bf16.msra.mxu0 0
  %169 = vmatprep.subr.bf16.mxu0 0
  %170 = vmatpush1.bf16.msra.mxu0 0
  %171 = vmatprep.subr.bf16.mxu0 0
  %172 = vmatpush1.bf16.msra.mxu0 0
  %173 = vmatprep.subr.bf16.mxu0 0
  %174 = vmatpush1.bf16.msra.mxu0 0
  %175 = vmatprep.subr.bf16.mxu0 0
  %176 = vmatpush1.bf16.msra.mxu0 0
  %177 = vmatprep.subr.bf16.mxu0 0
  %178 = vmatpush1.bf16.msra.mxu0 0
  %179 = vmatprep.subr.bf16.mxu0 0
  %180 = vmatpush1.bf16.msra.mxu0 0
  %181 = vmatprep.subr.bf16.mxu0 0
  %182 = vmatpush1.bf16.msra.mxu0 0
  %183 = vmatprep.mubr.bf16.mxu0 0
  %184 = vmatmul.mubr.bf16.gmra.mrb[0].mxu0 %v79
  %v185 = vpop.f32.mrb[0].mxu0
  %v186 = vadd.f32 %v101, %v185
  %v187 = vpop.f32.mrb[0].mxu0
  %v188 = vpop.f32.mrb[0].mxu0
  %v189 = vpop.f32.mrb[0].mxu0
  %190 = vdwg.mxu0
  %v191 = vmax.f32 %v186, 0.0
  %v192 = vpack.c.bf16 %v191, %v191
  %v193 = vld [vmem:[%s5] sm:$0xf]
  %v194 = vld [vmem:[%s5 + $0x4] sm:$0xf]
  %v195 = vld [vmem:[%s5 + $0x8] sm:$0xf]
  %v196 = vld [vmem:[%s5 + $0xc] sm:$0xf]
  %v197 = vld [vmem:[%s5 + $0x10] sm:$0xf]
  %v198 = vld [vmem:[%s5 + $0x14] sm:$0xf]
  %v199 = vld [vmem:[%s5 + $0x18] sm:$0xf]
  %v200 = vld [vmem:[%s5 + $0x1c] sm:$0xf]
  %v201 = vld [vmem:[%s5 + $0x20] sm:$0xf]
  %v202 = vld [vmem:[%s5 + $0x24] sm:$0xf]
  %v203 = vld [vmem:[%s5 + $0x28] sm:$0xf]
  %v204 = vld [vmem:[%s5 + $0x2c] sm:$0xf]
  %v205 = vld [vmem:[%s5 + $0x30] sm:$0xf]
  %v206 = vld [vmem:[%s5 + $0x34] sm:$0xf]
  %v207 = vld [vmem:[%s5 + $0x38] sm:$0xf]
  %v208 = vld [vmem:[%s5 + $0x3c] sm:$0xf]
  %v209 = vld [vmem:[%s6] sm:$0x1]
  %v211 = vlaneseq
  %v212 = vshrl.u32 %v211, 7
  %v213 = vsub.s32 0, %v212
  %v214 = vrot.slane %v209, %v213
  %v232 = vunpack.c.l.b16 %v193
  %v233 = vunpack.c.l.b16 %v194
  %v234 = vunpack.c.l.b16 %v195
  %v235 = vunpack.c.l.b16 %v196
  %v236 = vunpack.c.l.b16 %v197
  %v237 = vunpack.c.l.b16 %v198
  %v238 = vunpack.c.l.b16 %v199
  %v239 = vunpack.c.l.b16 %v200
  %v240 = vunpack.c.l.b16 %v201
  %v241 = vunpack.c.l.b16 %v202
  %v242 = vunpack.c.l.b16 %v203
  %v243 = vunpack.c.l.b16 %v204
  %v244 = vunpack.c.l.b16 %v205
  %v245 = vunpack.c.l.b16 %v206
  %v246 = vunpack.c.l.b16 %v207
  %v247 = vunpack.c.l.b16 %v208
  %v248 = vpack.c.b16 %v233, %v232
  %v249 = vpack.c.b16 %v235, %v234
  %v250 = vpack.c.b16 %v237, %v236
  %v251 = vpack.c.b16 %v239, %v238
  %v252 = vpack.c.b16 %v241, %v240
  %v253 = vpack.c.b16 %v243, %v242
  %v254 = vpack.c.b16 %v245, %v244
  %v255 = vpack.c.b16 %v247, %v246
  %264 = vmatprep.subr.bf16.mxu0 0
  %265 = vmatpush1.bf16.msra.mxu0 %v248
  %266 = vmatprep.subr.bf16.mxu0 0
  %267 = vmatpush1.bf16.msra.mxu0 %v249
  %268 = vmatprep.subr.bf16.mxu0 0
  %269 = vmatpush1.bf16.msra.mxu0 %v250
  %270 = vmatprep.subr.bf16.mxu0 0
  %271 = vmatpush1.bf16.msra.mxu0 %v251
  %272 = vmatprep.subr.bf16.mxu0 0
  %273 = vmatpush1.bf16.msra.mxu0 %v252
  %274 = vmatprep.subr.bf16.mxu0 0
  %275 = vmatpush1.bf16.msra.mxu0 %v253
  %276 = vmatprep.subr.bf16.mxu0 0
  %277 = vmatpush1.bf16.msra.mxu0 %v254
  %278 = vmatprep.subr.bf16.mxu0 0
  %279 = vmatpush1.bf16.msra.mxu0 %v255
  %280 = vmatprep.subr.bf16.mxu0 0
  %281 = vmatpush1.bf16.msra.mxu0 0
  %282 = vmatprep.subr.bf16.mxu0 0
  %283 = vmatpush1.bf16.msra.mxu0 0
  %284 = vmatprep.subr.bf16.mxu0 0
  %285 = vmatpush1.bf16.msra.mxu0 0
  %286 = vmatprep.subr.bf16.mxu0 0
  %287 = vmatpush1.bf16.msra.mxu0 0
  %288 = vmatprep.subr.bf16.mxu0 0
  %289 = vmatpush1.bf16.msra.mxu0 0
  %290 = vmatprep.subr.bf16.mxu0 0
  %291 = vmatpush1.bf16.msra.mxu0 0
  %292 = vmatprep.subr.bf16.mxu0 0
  %293 = vmatpush1.bf16.msra.mxu0 0
  %294 = vmatprep.subr.bf16.mxu0 0
  %295 = vmatpush1.bf16.msra.mxu0 0
  %296 = vmatprep.mubr.bf16.mxu0 0
  %297 = vmatmul.mubr.bf16.gmra.mrb[0].mxu0 %v192
  %v298 = vpop.f32.mrb[0].mxu0
  %v299 = vadd.f32 %v214, %v298
  %v300 = vpop.f32.mrb[0].mxu0
  %v301 = vpop.f32.mrb[0].mxu0
  %v302 = vpop.f32.mrb[0].mxu0
  %303 = vdwg.mxu0
  %vm304 = vcmask 15360
  %305 = vst.msk [vmem:[%s7] sm:$0xff] %vm304, %v299
  // Predicated region
  $region30: #{dqn_forward.1} parent=0 // pred_check
    _
  $region31: #{dqn_forward.1} parent=0 // pred_check_branch
    %307 = sbr.rel (0) target = $region33
  $region32: #{dqn_forward.1} parent=0 // pred_region
    _
  $region33: #{dqn_forward.1} parent=0 // pred_fallthru
    _
  // Predicated region
  $region34: #{dqn_forward.1} parent=0 // pred_check
    _
  $region35: #{dqn_forward.1} parent=0 // pred_check_branch
    %309 = sbr.rel (0) target = $region37
  $region36: #{dqn_forward.1} parent=0 // pred_region
    _
  $region37: #{dqn_forward.1} parent=0 // pred_fallthru
    _

</llo_original>
